<compile_context>
chip_gen: v7x
topology: tpu7x:2x2x1
jax: 0.10.0
libtpu: 0.0.40
codegen_flags: <defaults>
</compile_context>

<pallas_src>
import math
import functools

import jax
import jax.numpy as jnp
from jax.experimental import pallas as pl
from jax.experimental.pallas import tpu as pltpu

# Explicit scoped-VMEM cap: above the 16/32 MiB defaults, comfortably under
# v7x's 64 MiB physical VMEM.
_VMEM_LIMIT = 48 * 1024 * 1024


# ----------------------------- helpers --------------------------------------
def _round_up(n, m):
    return ((n + m - 1) // m) * m


def _pad_axis(a, axis, new_size):
    if a.shape[axis] == new_size:
        return a
    pads = [(0, 0)] * a.ndim
    pads[axis] = (0, new_size - a.shape[axis])
    return jnp.pad(a, pads)


def _pick_tile(n, max_tile, align):
    """Largest `align`-multiple divisor of n <= max_tile, else the full axis
    (a full-extent block is always legal)."""
    if n <= max_tile:
        return n
    t = (max_tile // align) * align
    while t >= align:
        if n % t == 0:
            return t
        t -= align
    return n


def _batch_tile(b_pad, max_tile, align, min_steps=2):
    """Largest `align`-multiple divisor of b_pad <= max_tile, preferring a tile
    that leaves >= min_steps grid steps (v7x megacore sharding + DMA/compute
    overlap) whenever b_pad is large enough."""
    cap = min(max_tile, b_pad)
    if b_pad >= align * min_steps:
        cap = min(cap, b_pad // min_steps)
    best = b_pad                      # full axis is always a legal fallback
    t = align
    while t <= cap:
        if b_pad % t == 0:
            best = t
        t += align
    return best


# ----------------------------- 'sum' ----------------------------------------
def _sum_kernel(x_ref, w_ref, o_ref):
    # w already carries the 1/P of torch.mean (folded at init):
    # one VPU multiply + one sublane reduce.
    o_ref[...] = jnp.sum(x_ref[...] * w_ref[...][None], axis=1).astype(o_ref.dtype)


def proto_agg_sum(x, w_over_p, *, batch_tile=None):
    B, P, D = x.shape
    if batch_tile is None:
        # target ~4 MiB x blocks so the ~0.35us/step grid overhead stays far
        # below the HBM time even at v7x bandwidth.
        batch_tile = max(8, ((4 << 20) // (P * D * 4)) // 8 * 8)
    b_pad = _round_up(B, 8)
    bt = _batch_tile(b_pad, batch_tile, 8)
    xp = _pad_axis(x, 0, b_pad)
    out = pl.pallas_call(
        _sum_kernel,
        out_shape=jax.ShapeDtypeStruct((b_pad, D), x.dtype),
        grid=(b_pad // bt,),
        in_specs=[pl.BlockSpec((bt, P, D), lambda i: (i, 0, 0)),
                  pl.BlockSpec((P, D), lambda i: (0, 0))],
        out_specs=pl.BlockSpec((bt, D), lambda i: (i, 0)),
        compiler_params=pltpu.CompilerParams(
            dimension_semantics=("parallel",), vmem_limit_bytes=_VMEM_LIMIT),
        cost_estimate=pl.CostEstimate(
            flops=2 * b_pad * P * D, transcendentals=0,
            bytes_accessed=4 * (b_pad * P * D + P * D + b_pad * D)),
    )(xp, w_over_p)
    return out[:B]


# --------------------- 'linear' / 'conv' (shared matmul) --------------------
def _matmul_bias_kernel(x_ref, w_ref, b_ref, o_ref, acc_ref):
    @pl.when(pl.program_id(2) == 0)
    def _():
        acc_ref[...] = jnp.zeros_like(acc_ref)

    # bf16 operands on the MXU, f32 accumulation.
    acc_ref[...] += jnp.dot(x_ref[...].astype(jnp.bfloat16), w_ref[...],
                            preferred_element_type=jnp.float32)

    @pl.when(pl.program_id(2) == pl.num_programs(2) - 1)
    def _():
        o_ref[...] = (acc_ref[...] + b_ref[...]).astype(o_ref.dtype)


def proto_agg_matmul(x2d, w_bf16, bias_row, n_out, *,
                     batch_tile=512, n_tile=512, k_tile=1024):
    """Returns (x2d @ w_bf16 + bias_row)[:B, :n_out]; w_bf16's last dim is
    already zero-padded to a multiple of 128 at init (lane-dense stores)."""
    B, K = x2d.shape
    Kw, Np = w_bf16.shape
    assert Kw == K
    b_pad = _round_up(B, 8)
    bt = _batch_tile(b_pad, batch_tile, 8)
    tn = _pick_tile(Np, n_tile, 128)
    tk = _pick_tile(K, k_tile, 128)
    gb, gn, gk = b_pad // bt, Np // tn, K // tk
    xp = _pad_axis(x2d, 0, b_pad)
    out = pl.pallas_call(
        _matmul_bias_kernel,
        out_shape=jax.ShapeDtypeStruct((b_pad, Np), x2d.dtype),
        grid=(gb, gn, gk),
        in_specs=[pl.BlockSpec((bt, tk), lambda i, j, k: (i, k)),
                  pl.BlockSpec((tk, tn), lambda i, j, k: (k, j)),
                  pl.BlockSpec((1, tn), lambda i, j, k: (0, j))],
        out_specs=pl.BlockSpec((bt, tn), lambda i, j, k: (i, j)),
        scratch_shapes=[pltpu.VMEM((bt, tn), jnp.float32)],
        compiler_params=pltpu.CompilerParams(
            dimension_semantics=("parallel", "parallel", "arbitrary"),
            vmem_limit_bytes=_VMEM_LIMIT),
        cost_estimate=pl.CostEstimate(
            flops=2 * b_pad * K * Np, transcendentals=0,
            bytes_accessed=(4 * b_pad * K * gn          # x, re-read per N tile
                            + 2 * K * Np * gb           # bf16 weight per batch tile
                            + 4 * b_pad * Np + 4 * Np)),
    )(xp, w_bf16, bias_row)
    return out[:B, :n_out]


# -------------------------- 'attention' -------------------------------------
def _attn_kernel(xT_ref, wqkv_ref, bqkv_ref, wo_ref, bo_ref, oT_ref, *,
                 n_protos, d_pad):
    P, Dp = n_protos, d_pad
    bt = xT_ref.shape[2]

    # Fused per-proto q/k/v projection on the MXU: (3*Dp, D) @ (D, bt).
    # The batch stays on the lane axis from here on (lane-dense VPU/EUP work);
    # 1/sqrt(D) is folded into the q rows/bias at init.
    qT, kT, vT = [], [], []
    for p in range(P):
        xTp = xT_ref[p].astype(jnp.bfloat16)                    # (D, bt)
        qkv = jnp.dot(wqkv_ref[p], xTp,
                      preferred_element_type=jnp.float32) + bqkv_ref[p]
        qT.append(qkv[:Dp])
        kT.append(qkv[Dp:2 * Dp])
        vT.append(qkv[2 * Dp:])

    # Scores row-by-row: only (P, bt) values live at a time, never a
    # (P, P, bt, D) outer product.  col[j, b] = sum_i softmax_j(scores)[i, j, b].
    col = jnp.zeros((P, bt), jnp.float32)
    for i in range(P):
        row = jnp.concatenate(
            [jnp.sum(qT[i] * kT[j], axis=0, keepdims=True) for j in range(P)],
            axis=0)                                             # (P, bt)
        e = jnp.exp(row - jnp.max(row, axis=0, keepdims=True))
        col = col + e * pl.reciprocal(jnp.sum(e, axis=0, keepdims=True),
                                      approx=False)

    # aggT[d, b] = sum_j col[j, b] * v_j[b, d]  (still lane-dense in b)
    aggT = jnp.zeros((Dp, bt), jnp.float32)
    for j in range(P):
        aggT = aggT + col[j:j + 1] * vT[j]

    outT = jnp.dot(wo_ref[...], aggT.astype(jnp.bfloat16),
                   preferred_element_type=jnp.float32) + bo_ref[...]
    oT_ref[...] = outT.astype(oT_ref.dtype)


def proto_agg_attention(x, wqkv, bqkv, wo, bo_col, *, batch_tile=128):
    B, P, D = x.shape
    Dp = wo.shape[0]
    # The batch lives on the lane axis inside this kernel: tiles must be either
    # the full (8-aligned) axis or a multiple of 128.
    if _round_up(B, 8) <= min(batch_tile, 128):
        b_pad = bt = _round_up(B, 8)
    else:
        b_pad = _round_up(B, 128)
        bt = _batch_tile(b_pad, batch_tile, 128)
    xT = jnp.transpose(_pad_axis(x, 0, b_pad), (1, 2, 0))       # (P, D, b_pad)
    kern = functools.partial(_attn_kernel, n_protos=P, d_pad=Dp)
    flops = b_pad * (2 * P * D * 3 * Dp + 2 * P * P * Dp + 6 * P * P
                     + 2 * P * Dp + 2 * Dp * Dp)
    bytes_accessed = (4 * b_pad * P * D + 2 * P * 3 * Dp * D + 4 * P * 3 * Dp
                      + 2 * Dp * Dp + 4 * Dp + 4 * b_pad * Dp)
    outT = pl.pallas_call(
        kern,
        out_shape=jax.ShapeDtypeStruct((Dp, b_pad), x.dtype),
        grid=(b_pad // bt,),
        in_specs=[pl.BlockSpec((P, D, bt), lambda i: (0, 0, i)),
                  # Constant-index weights: loaded once, kept VMEM-resident.
                  # TODO(synk): consider pipeline_mode=pl.Buffered(1) on these
                  # constant blocks to halve weight residency on v7x at large D
                  # (left default-buffered here for lowering safety).
                  pl.BlockSpec((P, 3 * Dp, D), lambda i: (0, 0, 0)),
                  pl.BlockSpec((P, 3 * Dp, 1), lambda i: (0, 0, 0)),
                  pl.BlockSpec((Dp, Dp), lambda i: (0, 0)),
                  pl.BlockSpec((Dp, 1), lambda i: (0, 0))],
        out_specs=pl.BlockSpec((Dp, bt), lambda i: (0, i)),
        compiler_params=pltpu.CompilerParams(
            dimension_semantics=("parallel",), vmem_limit_bytes=_VMEM_LIMIT),
        cost_estimate=pl.CostEstimate(
            flops=flops, transcendentals=b_pad * P * P,
            bytes_accessed=bytes_accessed),
    )(xT, wqkv, bqkv, wo, bo_col)
    return jnp.transpose(outT[:D, :B], (1, 0))


# --------------------------- module wrapper ----------------------------------
class ProtoAggregateLayer:
    """JAX/Pallas port of the PyTorch ProtoAggregateLayer (forward only).

    NOTE: kernel-ready derived weights (fused / padded / transposed / bf16)
    are cached once in __init__; if self.params are ever mutated the cached
    copies must be rebuilt (staleness hazard flagged in review).
    """

    def __init__(self, n_protos, dim_protos, device='cpu', layer_type='sum',
                 train_pw=False, key=None):
        del device, train_pw
        self.n_protos = n_protos
        self.dim_protos = dim_protos
        self.layer_type = layer_type
        if key is None:
            key = jax.random.PRNGKey(0)
        P, D = n_protos, dim_protos
        Dp = _round_up(D, 128)                       # lane-dense output width
        self._d_pad = Dp
        ks = jax.random.split(key, 8)
        u = lambda k, shape: jax.random.uniform(k, shape, jnp.float32, -0.1, 0.1)

        if layer_type == 'sum':
            self.params = {'w': jnp.ones((P, D), jnp.float32)}
            self._w_over_p = self.params['w'] / P    # fold the mean's 1/P
        elif layer_type == 'linear':
            N = P * D
            w = u(ks[0], (N, N))
            self.params = {'w': w}
            Np = _round_up(N, 128)
            # out = x @ w.T : pre-transpose, zero-pad N -> Np lanes, cast bf16.
            self._wt = _pad_axis(jnp.asarray(w.T), 1, Np).astype(jnp.bfloat16)
            self._b_row = jnp.zeros((1, Np), jnp.float32)   # torch layer: no bias
            self._n_out = N
        elif layer_type == 'conv':
            w, b = u(ks[0], (D, D, P)), u(ks[1], (D,))
            self.params = {'w': w, 'b': b}
            # Conv1d(D, D, kernel_size=P) over the permuted input spans the whole
            # length -> one matmul; weight flattened p-major / ci-minor to match
            # x.reshape(B, P*D).  Output columns padded D -> Dp for dense stores.
            w_flat = jnp.transpose(w, (2, 1, 0)).reshape(P * D, D)
            self._w_flat = _pad_axis(w_flat, 1, Dp).astype(jnp.bfloat16)
            self._b_row = _pad_axis(b.reshape(1, D), 1, Dp)
            self._n_out = D
        elif layer_type in ('simple_attention', 'attention'):
            self.params = {
                'wq': u(ks[0], (P, D, D)), 'bq': u(ks[1], (P, D)),
                'wk': u(ks[2], (P, D, D)), 'bk': u(ks[3], (P, D)),
                'wv': u(ks[4], (P, D, D)), 'bv': u(ks[5], (P, D)),
                'wo': u(ks[6], (D, D)),    'bo': u(ks[7], (D,)),
            }
            p_ = self.params
            inv = 1.0 / math.sqrt(D)        # fold 1/sqrt(D) into q weights/bias
            pad_out = lambda w3: _pad_axis(w3, 1, Dp)      # (P, D, D) -> (P, Dp, D)
            # Fused q/k/v weight (transposed formulation: qT = Wq @ xT), bf16.
            self._wqkv = jnp.concatenate(
                [pad_out(p_['wq'] * inv), pad_out(p_['wk']), pad_out(p_['wv'])],
                axis=1).astype(jnp.bfloat16)               # (P, 3*Dp, D)
            pad_b = lambda b2: _pad_axis(b2, 1, Dp)        # (P, D) -> (P, Dp)
            self._bqkv = jnp.concatenate(
                [pad_b(p_['bq'] * inv), pad_b(p_['bk']), pad_b(p_['bv'])],
                axis=1)[..., None]                         # (P, 3*Dp, 1) f32
            self._wo = _pad_axis(_pad_axis(p_['wo'], 0, Dp), 1, Dp).astype(jnp.bfloat16)
            self._bo = _pad_axis(p_['bo'][:, None], 0, Dp)  # (Dp, 1) f32
        else:
            raise ValueError('Aggregation layer type not supported.')

    def __call__(self, x):
        B = x.shape[0]
        if self.layer_type == 'sum':
            return proto_agg_sum(x, self._w_over_p)
        if self.layer_type == 'linear':
            return proto_agg_matmul(x.reshape(B, -1), self._wt, self._b_row,
                                    self._n_out)
        if self.layer_type == 'conv':
            return proto_agg_matmul(x.reshape(B, -1), self._w_flat, self._b_row,
                                    self._n_out)
        return proto_agg_attention(x, self._wqkv, self._bqkv, self._wo, self._bo)

    # pure-JAX reference (mirrors the PyTorch forward) for correctness checks
    def reference(self, x):
        p = self.params
        B = x.shape[0]
        if self.layer_type == 'sum':
            return jnp.mean(p['w'][None] * x, axis=1)
        if self.layer_type == 'linear':
            return x.reshape(B, -1) @ p['w'].T
        if self.layer_type == 'conv':
            return jnp.einsum('bpc,ocp->bo', x, p['w']) + p['b']
        P, D = self.n_protos, self.dim_protos
        q = jnp.stack([x[:, i] @ p['wq'][i].T + p['bq'][i] for i in range(P)], axis=1)
        k = jnp.stack([x[:, i] @ p['wk'][i].T + p['bk'][i] for i in range(P)], axis=1)
        v = jnp.stack([x[:, i] @ p['wv'][i].T + p['bv'][i] for i in range(P)], axis=1)
        scores = jnp.einsum('bid,bjd->bij', q, k) / math.sqrt(D)
        scores = jax.nn.softmax(scores, axis=-1)
        out = jnp.einsum('bij,bjd->bid', scores, v)
        agg = jnp.sum(out, axis=1)
        return agg @ p['wo'].T + p['bo']


if __name__ == "__main__":
    B, P, D = 2, 4, 32
    key = jax.random.PRNGKey(0)
    kx, kp = jax.random.split(key)
    x = jax.random.normal(kx, (B, P, D), jnp.float32)

    # bf16 MXU operands (per perf review) -> slightly looser tolerances on the
    # matmul-heavy paths; 'sum' is pure f32 VPU work.
    tol = {'sum': 1e-5, 'linear': 2e-2, 'conv': 2e-2, 'simple_attention': 2e-2}

    for layer_type in ['sum', 'linear', 'conv', 'simple_attention']:
        layer = ProtoAggregateLayer(P, D, layer_type=layer_type, key=kp)
        out = jax.block_until_ready(layer(x))
        ref = layer.reference(x)
        assert out.shape == ref.shape, (layer_type, out.shape, ref.shape)
        t = tol[layer_type]
        err = float(jnp.max(jnp.abs(out - ref)))
        assert jnp.allclose(out, ref, atol=t, rtol=t), (layer_type, err)

    print("KERNEL_OK")
</pallas_src>

<mosaic_0001>
module attributes {stable_mosaic.version = 11 : i64} {
  func.func @_sum_kernel(%arg0: i32, %arg1: memref<8x4x32xf32, #tpu.memory_space<vmem>>, %arg2: memref<4x32xf32, #tpu.memory_space<vmem>>, %arg3: memref<8x32xf32, #tpu.memory_space<vmem>>) attributes {dimension_semantics = [#tpu.dimension_semantics<parallel>], iteration_bounds = array<i64: 1>, scalar_prefetch = 0 : i64, scratch_operands = 0 : i64, tpu.core_type = #tpu.core_type<tc>, window_params = [{transform_indices = @transform_0, window_bounds = array<i64: 8, 4, 32>}, {pipeline_mode = #tpu.pipeline_mode<synchronous>, transform_indices = @transform_1, window_bounds = array<i64: 4, 32>}, {transform_indices = @transform_2, window_bounds = array<i64: 8, 32>}]} {
    %c0 = arith.constant 0 : index
    %c0_0 = arith.constant 0 : index
    %c0_1 = arith.constant 0 : index
    %0 = vector.load %arg1[%c0, %c0_0, %c0_1] : memref<8x4x32xf32, #tpu.memory_space<vmem>>, vector<8x4x32xf32>
    %c0_2 = arith.constant 0 : index
    %c0_3 = arith.constant 0 : index
    %1 = vector.load %arg2[%c0_2, %c0_3] : memref<4x32xf32, #tpu.memory_space<vmem>>, vector<4x32xf32>
    %2 = vector.shape_cast %1 : vector<4x32xf32> to vector<1x4x32xf32>
    %3 = vector.broadcast %2 : vector<1x4x32xf32> to vector<8x4x32xf32>
    %4 = arith.mulf %0, %3 : vector<8x4x32xf32>
    %cst = arith.constant dense<0.000000e+00> : vector<8x32xf32>
    %5 = vector.multi_reduction <add>, %4, %cst [1] : vector<8x4x32xf32> to vector<8x32xf32>
    %c0_4 = arith.constant 0 : index
    %c0_5 = arith.constant 0 : index
    %6 = vector.load %arg3[%c0_4, %c0_5] : memref<8x32xf32, #tpu.memory_space<vmem>>, vector<8x32xf32>
    tpu.vector_store %arg3[%c0_4, %c0_5], %5 {strides = array<i32>} : memref<8x32xf32, #tpu.memory_space<vmem>>, vector<8x32xf32>,
    return
  }
  func.func @transform_0(%arg0: i32) -> (i32, i32, i32) {
    %c0_i32 = arith.constant 0 : i32
    %c0_i32_0 = arith.constant 0 : i32
    %c0_i32_1 = arith.constant 0 : i32
    return %arg0, %c0_i32, %c0_i32_0 : i32, i32, i32
  }
  func.func @transform_1(%arg0: i32) -> (i32, i32) {
    %c0_i32 = arith.constant 0 : i32
    %c0_i32_0 = arith.constant 0 : i32
    %c0_i32_1 = arith.constant 0 : i32
    return %c0_i32, %c0_i32_0 : i32, i32
  }
  func.func @transform_2(%arg0: i32) -> (i32, i32) {
    %c0_i32 = arith.constant 0 : i32
    %c0_i32_0 = arith.constant 0 : i32
    return %arg0, %c0_i32 : i32, i32
  }
}

</mosaic_0001>

<llo_original>
// kernel: tpu_custom_call.1
$region0: #{tpu_custom_call.1}
  #allocation0 [shape = 'u32[]', space=smem, size = 0x4, offset = 0x4, fixed_abs, tag = 'smem constant byte address 0x4 - core index']
  #allocation1 [shape = 'u32[144,128]{1,0:T(1,128)}', space=vmem, size = 0x12000, scoped, tag = 'internal scratch']
  %s0 = inlined_call_operand.hbm [shape: f32[8,4,32], index: 0, kind: input, shape index: {}]
  %s1 = inlined_call_operand.hbm [shape: f32[4,32], index: 1, kind: input, shape index: {}]
  %s2 = inlined_call_operand.hbm [shape: f32[8,32], index: 2, kind: output, shape index: {}]
  %s3 = sld [smem:[#allocation0]]
  $region26: #{tpu_custom_call.1} parent=0
    _
  %s5 = ssub.s32 1, %s3
  %s6 = scalar_select 0, %s5, %s3
  $region1: #{tpu_custom_call.1} parent=0
    #allocation2 [shape = 'u8[16384]{0}', space=vmem, size = 0x4000, scoped, tag = 'input window, operand 0, single buffered']
    #allocation3 [shape = 's32[1]{0}', space=sflag, size = 0x4, scoped, tag = 'scoped memory for tpu_custom_call.1']
    #allocation4 [shape = 's32[1]{0}', space=sflag, size = 0x4, scoped, tag = 'scoped memory for tpu_custom_call.1']
    #allocation5 [shape = 'u8[2048]{0}', space=vmem, size = 0x800, scoped, tag = 'input window, operand 1, single buffered']
    #allocation6 [shape = 's32[1]{0}', space=sflag, size = 0x4, scoped, tag = 'scoped memory for tpu_custom_call.1']
    #allocation7 [shape = 'u8[4096]{0}', space=vmem, size = 0x1000, scoped, tag = 'output window, operand 0, single buffered']
    %7 = vsyncpa [#allocation3], 0
    %8 = vsyncpa [#allocation6], 0
    %9 = vsyncpa [#allocation4], 0
    // Predicated region
    $region2: #{tpu_custom_call.1} parent=1 // pred_check
      _
    $region3: #{tpu_custom_call.1} parent=1 // pred_check_branch
      %11 = sbr.rel (0) target = $region5
    $region4: #{tpu_custom_call.1} parent=1 // pred_region
      %s13 = ssub.s32 512, 512
      %14 = vsyncadd [#allocation3], %s13
      %s15 = sshll.u32 [#allocation2], 4
      %s16 = int_to_ptr.vmem [resolvable:$true] %s15
      %21 = dma.hbm_to_vmem [thread:$0]  %s0, 512, %s16, [#allocation3], 64, 64, 4
    $region5: #{tpu_custom_call.1} parent=1 // pred_fallthru
      _
    // Predicated region
    $region6: #{tpu_custom_call.1} parent=1 // pred_check
      _
    $region7: #{tpu_custom_call.1} parent=1 // pred_check_branch
      %23 = sbr.rel (0) target = $region9
    $region8: #{tpu_custom_call.1} parent=1 // pred_region
      %s25 = ssub.s32 64, 64
      %26 = vsyncadd [#allocation6], %s25
      %s28 = sshll.u32 [#allocation5], 4
      %s29 = int_to_ptr.vmem [resolvable:$true] %s28
      %31 = dma.hbm_to_vmem [thread:$0]  %s1, 64, %s29, [#allocation6]
    $region9: #{tpu_custom_call.1} parent=1 // pred_fallthru
      _
    // Predicated region
    $region10: #{tpu_custom_call.1} parent=1 // pred_check
      _
    $region11: #{tpu_custom_call.1} parent=1 // pred_check_branch
      %33 = sbr.rel (0) target = $region13
    $region12: #{tpu_custom_call.1} parent=1 // pred_region
      %34 = dma.done [#allocation3], 512
    $region13: #{tpu_custom_call.1} parent=1 // pred_fallthru
      _
    // Predicated region
    $region14: #{tpu_custom_call.1} parent=1 // pred_check
      _
    $region15: #{tpu_custom_call.1} parent=1 // pred_check_branch
      %36 = sbr.rel (0) target = $region17
    $region16: #{tpu_custom_call.1} parent=1 // pred_region
      %37 = dma.done [#allocation6], 64
    $region17: #{tpu_custom_call.1} parent=1 // pred_fallthru
      _
    %v38 = vld [vmem:[#allocation2] sm:$0xf]
    %v39 = vld [vmem:[#allocation2 + $0x4] sm:$0xf]
    %v40 = vld [vmem:[#allocation2 + $0x8] sm:$0xf]
    %v41 = vld [vmem:[#allocation2 + $0xc] sm:$0xf]
    %v42 = vld [vmem:[#allocation2 + $0x10] sm:$0xf]
    %v43 = vld [vmem:[#allocation2 + $0x14] sm:$0xf]
    %v44 = vld [vmem:[#allocation2 + $0x18] sm:$0xf]
    %v45 = vld [vmem:[#allocation2 + $0x1c] sm:$0xf]
    %v46 = vld [vmem:[#allocation5] sm:$0xf]
    %v47 = vmul.f32 %v38, %v46
    %v48 = vmul.f32 %v39, %v46
    %v49 = vmul.f32 %v40, %v46
    %v50 = vmul.f32 %v41, %v46
    %v51 = vmul.f32 %v42, %v46
    %v52 = vmul.f32 %v43, %v46
    %v53 = vmul.f32 %v44, %v46
    %v54 = vmul.f32 %v45, %v46
    %vm55 = vcmask 257024
    %v56 = vsel %vm55, %v47, 0.0
    %v57 = vrot.slane %v56, 4
    %v58 = vadd.f32 %v56, %v57
    %v59 = vrot.slane %v58, 2
    %v60 = vadd.f32 %v58, %v59
    %v61 = vrot.slane %v60, 1
    %v62 = vadd.f32 %v60, %v61
    %v63 = vsel %vm55, %v48, 0.0
    %v64 = vrot.slane %v63, 4
    %v65 = vadd.f32 %v63, %v64
    %v66 = vrot.slane %v65, 2
    %v67 = vadd.f32 %v65, %v66
    %v68 = vrot.slane %v67, 1
    %v69 = vadd.f32 %v67, %v68
    %v70 = vsel %vm55, %v49, 0.0
    %v71 = vrot.slane %v70, 4
    %v72 = vadd.f32 %v70, %v71
    %v73 = vrot.slane %v72, 2
    %v74 = vadd.f32 %v72, %v73
    %v75 = vrot.slane %v74, 1
    %v76 = vadd.f32 %v74, %v75
    %v77 = vsel %vm55, %v50, 0.0
    %v78 = vrot.slane %v77, 4
    %v79 = vadd.f32 %v77, %v78
    %v80 = vrot.slane %v79, 2
    %v81 = vadd.f32 %v79, %v80
    %v82 = vrot.slane %v81, 1
    %v83 = vadd.f32 %v81, %v82
    %v84 = vsel %vm55, %v51, 0.0
    %v85 = vrot.slane %v84, 4
    %v86 = vadd.f32 %v84, %v85
    %v87 = vrot.slane %v86, 2
    %v88 = vadd.f32 %v86, %v87
    %v89 = vrot.slane %v88, 1
    %v90 = vadd.f32 %v88, %v89
    %v91 = vsel %vm55, %v52, 0.0
    %v92 = vrot.slane %v91, 4
    %v93 = vadd.f32 %v91, %v92
    %v94 = vrot.slane %v93, 2
    %v95 = vadd.f32 %v93, %v94
    %v96 = vrot.slane %v95, 1
    %v97 = vadd.f32 %v95, %v96
    %v98 = vsel %vm55, %v53, 0.0
    %v99 = vrot.slane %v98, 4
    %v100 = vadd.f32 %v98, %v99
    %v101 = vrot.slane %v100, 2
    %v102 = vadd.f32 %v100, %v101
    %v103 = vrot.slane %v102, 1
    %v104 = vadd.f32 %v102, %v103
    %v105 = vsel %vm55, %v54, 0.0
    %v106 = vrot.slane %v105, 4
    %v107 = vadd.f32 %v105, %v106
    %v108 = vrot.slane %v107, 2
    %v109 = vadd.f32 %v107, %v108
    %v110 = vrot.slane %v109, 1
    %v111 = vadd.f32 %v109, %v110
    %vm120 = vcmask 1041409
    %v121 = vsel %vm120, %v69, %v62
    %vm122 = vcmask 1042434
    %v123 = vsel %vm122, %v76, %v121
    %vm124 = vcmask 1043459
    %v125 = vsel %vm124, %v83, %v123
    %vm126 = vcmask 1044484
    %v127 = vsel %vm126, %v90, %v125
    %vm128 = vcmask 1045509
    %v129 = vsel %vm128, %v97, %v127
    %vm130 = vcmask 1046534
    %v131 = vsel %vm130, %v104, %v129
    %vm132 = vcmask 1047559
    %v133 = vsel %vm132, %v111, %v131
    %vm135 = vcmask 261120
    %136 = vst.msk [vmem:[#allocation7] sm:$0xff] %vm135, %v133
    // Predicated region
    $region18: #{tpu_custom_call.1} parent=1 // pred_check
      _
    $region19: #{tpu_custom_call.1} parent=1 // pred_check_branch
      %138 = sbr.rel (0) target = $region21
    $region20: #{tpu_custom_call.1} parent=1 // pred_region
      %s140 = ssub.s32 128, 128
      %141 = vsyncadd [#allocation4], %s140
      %s143 = sshll.u32 [#allocation7], 4
      %s144 = int_to_ptr.vmem [resolvable:$true] %s143
      %146 = dma.vmem_to_hbm [thread:$0]  %s144, 128, %s2, [#allocation4]
    $region21: #{tpu_custom_call.1} parent=1 // pred_fallthru
      _
    // Predicated region
    $region22: #{tpu_custom_call.1} parent=1 // pred_check
      _
    $region23: #{tpu_custom_call.1} parent=1 // pred_check_branch
      %148 = sbr.rel (0) target = $region25
    $region24: #{tpu_custom_call.1} parent=1 // pred_region
      %149 = dma.done [#allocation4], 128
    $region25: #{tpu_custom_call.1} parent=1 // pred_fallthru
      _
    %150 = vsyncpa [#allocation3], 1
    %151 = vsyncpa [#allocation6], 1
    %152 = vsyncpa [#allocation4], 1

</llo_original>
